<compile_context>
chip_gen: v7x
topology: tpu7x:2x2x1
jax: 0.10.0
libtpu: 0.0.40
codegen_flags: <defaults>
</compile_context>

<pallas_src>
import functools

import jax
import jax.numpy as jnp
from jax.experimental import pallas as pl
from jax.experimental.pallas import tpu as pltpu

IN_DIM = 527
H1 = 256
H2 = 128
OUT_DIM = 2
OUT_PAD = 128  # lane-dense padded output width (extra columns are exactly zero)


def _round_up(n, m):
    return ((n + m - 1) // m) * m


def _mlp_kernel(x_ref, w1_ref, b1_ref, w2_ref, b2_ref, w3_ref, b3_ref, o_ref):
    # Whole hot path (3 matmuls + bias adds + ReLUs) runs on-chip in one kernel body.
    # Matmul inputs in bf16 (fast MXU path), accumulation + elementwise in f32.
    x = x_ref[...].astype(jnp.bfloat16)
    h = jnp.dot(x, w1_ref[...], preferred_element_type=jnp.float32) + b1_ref[...]
    h = jnp.maximum(h, 0.0)
    h = jnp.dot(h.astype(jnp.bfloat16), w2_ref[...], preferred_element_type=jnp.float32) + b2_ref[...]
    h = jnp.maximum(h, 0.0)
    h = jnp.dot(h.astype(jnp.bfloat16), w3_ref[...], preferred_element_type=jnp.float32) + b3_ref[...]
    o_ref[...] = jnp.maximum(h, 0.0).astype(o_ref.dtype)


@functools.partial(jax.jit, static_argnames=("block_b",))
def grasp_eval_forward(x, params, block_b=256):
    """x: (B, 527) float32 (or bfloat16). Returns (B, 2) float32."""
    w1, b1, w2, b2, w3p, b3p = params
    B = x.shape[0]

    # Effective batch tile: big enough to feed the MXU, shrunk (to a multiple of 8)
    # for small batches so we don't allocate a huge mostly-empty VMEM tile.
    bb = min(block_b, _round_up(B, 8))
    grid = (pl.cdiv(B, bb),)  # boundary block may be partial; Pallas masks the tail writeback

    # Weights/biases are small: give every grid step the full tensor (block == full shape),
    # so they stay resident across the batch loop.
    full = lambda shape: pl.BlockSpec(shape, lambda i: (0,) * len(shape))

    weight_bytes = (
        IN_DIM * H1 * 2 + H1 * 4          # w1 (bf16) + b1 (f32)
        + H1 * H2 * 2 + H2 * 4            # w2 + b2
        + H2 * OUT_PAD * 2 + OUT_PAD * 4  # w3 (padded) + b3
    )
    cost = pl.CostEstimate(
        flops=2 * B * (IN_DIM * H1 + H1 * H2 + H2 * OUT_PAD),
        transcendentals=0,
        bytes_accessed=B * IN_DIM * jnp.dtype(x.dtype).itemsize + B * OUT_PAD * 4 + weight_bytes,
    )

    out = pl.pallas_call(
        _mlp_kernel,
        out_shape=jax.ShapeDtypeStruct((B, OUT_PAD), jnp.float32),
        grid_spec=pltpu.PrefetchScalarGridSpec(
            num_scalar_prefetch=0,
            grid=grid,
            in_specs=[
                pl.BlockSpec((bb, IN_DIM), lambda i: (i, 0)),  # x tile over batch
                full((IN_DIM, H1)),
                full((1, H1)),
                full((H1, H2)),
                full((1, H2)),
                full((H2, OUT_PAD)),
                full((1, OUT_PAD)),
            ],
            out_specs=pl.BlockSpec((bb, OUT_PAD), lambda i: (i, 0)),
        ),
        compiler_params=pltpu.CompilerParams(
            dimension_semantics=("parallel",),  # batch tiles split across TCs (v7x megacore)
        ),
        cost_estimate=cost,
    )(x, w1, b1, w2, b2, w3p, b3p)

    # Drop the zero-padded output lanes (tiny copy: B x 2 floats).
    return out[:, :OUT_DIM]


def init_params(key):
    """Deterministic init mimicking nn.Linear default (uniform +/- 1/sqrt(fan_in)).

    Weights stored (in, out) in bfloat16; biases kept float32; fc3 zero-padded to 128
    output columns so the kernel's output tile is lane-dense.
    """
    ks = jax.random.split(key, 6)

    def linear(kw, kb, fan_in, fan_out):
        bound = 1.0 / (fan_in ** 0.5)
        w = jax.random.uniform(kw, (fan_in, fan_out), jnp.float32, -bound, bound)
        b = jax.random.uniform(kb, (1, fan_out), jnp.float32, -bound, bound)
        return w, b

    w1, b1 = linear(ks[0], ks[1], IN_DIM, H1)
    w2, b2 = linear(ks[2], ks[3], H1, H2)
    w3, b3 = linear(ks[4], ks[5], H2, OUT_DIM)

    # Lane-dense head: extra columns are exactly zero and sliced off in the wrapper.
    w3p = jnp.zeros((H2, OUT_PAD), jnp.float32).at[:, :OUT_DIM].set(w3)
    b3p = jnp.zeros((1, OUT_PAD), jnp.float32).at[:, :OUT_DIM].set(b3)

    return (
        w1.astype(jnp.bfloat16), b1,
        w2.astype(jnp.bfloat16), b2,
        w3p.astype(jnp.bfloat16), b3p,
    )


def reference_forward(x, params):
    """Pure-JAX reference using the same bf16-inputs / f32-accumulate math."""
    w1, b1, w2, b2, w3p, b3p = params
    h = jnp.dot(x.astype(jnp.bfloat16), w1, preferred_element_type=jnp.float32) + b1
    h = jnp.maximum(h, 0.0)
    h = jnp.dot(h.astype(jnp.bfloat16), w2, preferred_element_type=jnp.float32) + b2
    h = jnp.maximum(h, 0.0)
    h = jnp.dot(h.astype(jnp.bfloat16), w3p, preferred_element_type=jnp.float32) + b3p
    h = jnp.maximum(h, 0.0)
    return h[:, :OUT_DIM]


if __name__ == "__main__":
    key = jax.random.PRNGKey(0)
    k_x, k_p = jax.random.split(key)

    B = 4  # small batch (partial boundary block exercises the ragged-tail path)
    x = jax.random.normal(k_x, (B, IN_DIM), jnp.float32)
    params = init_params(k_p)

    out = grasp_eval_forward(x, params)
    out = jax.block_until_ready(out)

    ref = reference_forward(x, params)
    assert out.shape == (B, OUT_DIM)
    assert jnp.allclose(out, ref, atol=1e-2, rtol=1e-2), "mismatch vs reference"

    # Note: trailing ReLU on the 2-wide head is intentional — it matches the PyTorch module.
    print("KERNEL_OK")
</pallas_src>

<mosaic_0001>
module attributes {stable_mosaic.version = 11 : i64} {
  func.func @_mlp_kernel(%arg0: i32, %arg1: memref<8x527xf32, #tpu.memory_space<vmem>>, %arg2: memref<527x256xbf16, #tpu.memory_space<vmem>>, %arg3: memref<1x256xf32, #tpu.memory_space<vmem>>, %arg4: memref<256x128xbf16, #tpu.memory_space<vmem>>, %arg5: memref<1x128xf32, #tpu.memory_space<vmem>>, %arg6: memref<128x128xbf16, #tpu.memory_space<vmem>>, %arg7: memref<1x128xf32, #tpu.memory_space<vmem>>, %arg8: memref<8x128xf32, #tpu.memory_space<vmem>>) attributes {dimension_semantics = [#tpu.dimension_semantics<parallel>], iteration_bounds = array<i64: 1>, scalar_prefetch = 0 : i64, scratch_operands = 0 : i64, tpu.core_type = #tpu.core_type<tc>, window_params = [{transform_indices = @transform_0, window_bounds = array<i64: 8, 527>}, {pipeline_mode = #tpu.pipeline_mode<synchronous>, transform_indices = @transform_1, window_bounds = array<i64: 527, 256>}, {pipeline_mode = #tpu.pipeline_mode<synchronous>, transform_indices = @transform_2, window_bounds = array<i64: 1, 256>}, {pipeline_mode = #tpu.pipeline_mode<synchronous>, transform_indices = @transform_3, window_bounds = array<i64: 256, 128>}, {pipeline_mode = #tpu.pipeline_mode<synchronous>, transform_indices = @transform_4, window_bounds = array<i64: 1, 128>}, {pipeline_mode = #tpu.pipeline_mode<synchronous>, transform_indices = @transform_5, window_bounds = array<i64: 128, 128>}, {pipeline_mode = #tpu.pipeline_mode<synchronous>, transform_indices = @transform_6, window_bounds = array<i64: 1, 128>}, {transform_indices = @transform_7, window_bounds = array<i64: 8, 128>}]} {
    %c0 = arith.constant 0 : index
    %c0_0 = arith.constant 0 : index
    %0 = vector.load %arg1[%c0, %c0_0] : memref<8x527xf32, #tpu.memory_space<vmem>>, vector<8x527xf32>
    %1 = arith.truncf %0 : vector<8x527xf32> to vector<8x527xbf16>
    %c0_1 = arith.constant 0 : index
    %c0_2 = arith.constant 0 : index
    %2 = vector.load %arg2[%c0_1, %c0_2] : memref<527x256xbf16, #tpu.memory_space<vmem>>, vector<527x256xbf16>
    %cst = arith.constant dense<0.000000e+00> : vector<8x256xf32>
    %3 = tpu.matmul %1, %2, %cst {dimension_numbers = #tpu.dot_dimension_numbers<[1], [0], [0], [1], [0, 0, 1, 1], [], []>} : vector<8x527xbf16>, vector<527x256xbf16>, vector<8x256xf32> -> vector<8x256xf32>
    %c0_3 = arith.constant 0 : index
    %c0_4 = arith.constant 0 : index
    %4 = vector.load %arg3[%c0_3, %c0_4] : memref<1x256xf32, #tpu.memory_space<vmem>>, vector<1x256xf32>
    %5 = vector.broadcast %4 : vector<1x256xf32> to vector<8x256xf32>
    %6 = arith.addf %3, %5 : vector<8x256xf32>
    %cst_5 = arith.constant 0.000000e+00 : f32
    %7 = vector.broadcast %cst_5 : f32 to vector<8x256xf32>
    %8 = arith.maximumf %6, %7 : vector<8x256xf32>
    %9 = arith.truncf %8 : vector<8x256xf32> to vector<8x256xbf16>
    %c0_6 = arith.constant 0 : index
    %c0_7 = arith.constant 0 : index
    %10 = vector.load %arg4[%c0_6, %c0_7] : memref<256x128xbf16, #tpu.memory_space<vmem>>, vector<256x128xbf16>
    %cst_8 = arith.constant dense<0.000000e+00> : vector<8x128xf32>
    %11 = tpu.matmul %9, %10, %cst_8 {dimension_numbers = #tpu.dot_dimension_numbers<[1], [0], [0], [1], [0, 0, 1, 1], [], []>} : vector<8x256xbf16>, vector<256x128xbf16>, vector<8x128xf32> -> vector<8x128xf32>
    %c0_9 = arith.constant 0 : index
    %c0_10 = arith.constant 0 : index
    %12 = vector.load %arg5[%c0_9, %c0_10] : memref<1x128xf32, #tpu.memory_space<vmem>>, vector<1x128xf32>
    %13 = vector.broadcast %12 : vector<1x128xf32> to vector<8x128xf32>
    %14 = arith.addf %11, %13 : vector<8x128xf32>
    %cst_11 = arith.constant 0.000000e+00 : f32
    %15 = vector.broadcast %cst_11 : f32 to vector<8x128xf32>
    %16 = arith.maximumf %14, %15 : vector<8x128xf32>
    %17 = arith.truncf %16 : vector<8x128xf32> to vector<8x128xbf16>
    %c0_12 = arith.constant 0 : index
    %c0_13 = arith.constant 0 : index
    %18 = vector.load %arg6[%c0_12, %c0_13] : memref<128x128xbf16, #tpu.memory_space<vmem>>, vector<128x128xbf16>
    %cst_14 = arith.constant dense<0.000000e+00> : vector<8x128xf32>
    %19 = tpu.matmul %17, %18, %cst_14 {dimension_numbers = #tpu.dot_dimension_numbers<[1], [0], [0], [1], [0, 0, 1, 1], [], []>} : vector<8x128xbf16>, vector<128x128xbf16>, vector<8x128xf32> -> vector<8x128xf32>
    %c0_15 = arith.constant 0 : index
    %c0_16 = arith.constant 0 : index
    %20 = vector.load %arg7[%c0_15, %c0_16] : memref<1x128xf32, #tpu.memory_space<vmem>>, vector<1x128xf32>
    %21 = vector.broadcast %20 : vector<1x128xf32> to vector<8x128xf32>
    %22 = arith.addf %19, %21 : vector<8x128xf32>
    %cst_17 = arith.constant 0.000000e+00 : f32
    %23 = vector.broadcast %cst_17 : f32 to vector<8x128xf32>
    %24 = arith.maximumf %22, %23 : vector<8x128xf32>
    %c0_18 = arith.constant 0 : index
    %c0_19 = arith.constant 0 : index
    %25 = vector.load %arg8[%c0_18, %c0_19] : memref<8x128xf32, #tpu.memory_space<vmem>>, vector<8x128xf32>
    tpu.vector_store %arg8[%c0_18, %c0_19], %24 {strides = array<i32>} : memref<8x128xf32, #tpu.memory_space<vmem>>, vector<8x128xf32>,
    return
  }
  func.func @transform_0(%arg0: i32) -> (i32, i32) {
    %c0_i32 = arith.constant 0 : i32
    %c0_i32_0 = arith.constant 0 : i32
    return %arg0, %c0_i32 : i32, i32
  }
  func.func @transform_1(%arg0: i32) -> (i32, i32) {
    %c0_i32 = arith.constant 0 : i32
    %c0_i32_0 = arith.constant 0 : i32
    %c0_i32_1 = arith.constant 0 : i32
    return %c0_i32, %c0_i32_0 : i32, i32
  }
  func.func @transform_2(%arg0: i32) -> (i32, i32) {
    %c0_i32 = arith.constant 0 : i32
    %c0_i32_0 = arith.constant 0 : i32
    %c0_i32_1 = arith.constant 0 : i32
    return %c0_i32, %c0_i32_0 : i32, i32
  }
  func.func @transform_3(%arg0: i32) -> (i32, i32) {
    %c0_i32 = arith.constant 0 : i32
    %c0_i32_0 = arith.constant 0 : i32
    %c0_i32_1 = arith.constant 0 : i32
    return %c0_i32, %c0_i32_0 : i32, i32
  }
  func.func @transform_4(%arg0: i32) -> (i32, i32) {
    %c0_i32 = arith.constant 0 : i32
    %c0_i32_0 = arith.constant 0 : i32
    %c0_i32_1 = arith.constant 0 : i32
    return %c0_i32, %c0_i32_0 : i32, i32
  }
  func.func @transform_5(%arg0: i32) -> (i32, i32) {
    %c0_i32 = arith.constant 0 : i32
    %c0_i32_0 = arith.constant 0 : i32
    %c0_i32_1 = arith.constant 0 : i32
    return %c0_i32, %c0_i32_0 : i32, i32
  }
  func.func @transform_6(%arg0: i32) -> (i32, i32) {
    %c0_i32 = arith.constant 0 : i32
    %c0_i32_0 = arith.constant 0 : i32
    %c0_i32_1 = arith.constant 0 : i32
    return %c0_i32, %c0_i32_0 : i32, i32
  }
  func.func @transform_7(%arg0: i32) -> (i32, i32) {
    %c0_i32 = arith.constant 0 : i32
    %c0_i32_0 = arith.constant 0 : i32
    return %arg0, %c0_i32 : i32, i32
  }
}

</mosaic_0001>

<llo_original>
// kernel: grasp_eval_forward.1
$region0: #{grasp_eval_forward.1}
  #allocation0 [shape = 'u32[]', space=smem, size = 0x4, offset = 0x4, fixed_abs, tag = 'smem constant byte address 0x4 - core index']
  #allocation1 [shape = 'u32[144,128]{1,0:T(1,128)}', space=vmem, size = 0x12000, scoped, tag = 'internal scratch']
  %s0 = inlined_call_operand.hbm [shape: f32[4,527], index: 0, kind: input, shape index: {}]
  %s1 = inlined_call_operand.hbm [shape: bf16[527,256], index: 1, kind: input, shape index: {}]
  %s2 = inlined_call_operand.vmem [shape: f32[1,256], index: 2, kind: input, shape index: {}]
  %s3 = inlined_call_operand.hbm [shape: bf16[256,128], index: 3, kind: input, shape index: {}]
  %s4 = inlined_call_operand.vmem [shape: f32[1,128], index: 4, kind: input, shape index: {}]
  %s5 = inlined_call_operand.hbm [shape: bf16[128,128], index: 5, kind: input, shape index: {}]
  %s6 = inlined_call_operand.vmem [shape: f32[1,128], index: 6, kind: input, shape index: {}]
  %s7 = inlined_call_operand.vmem [shape: f32[4,128], index: 7, kind: output, shape index: {}]
  %s8 = sld [smem:[#allocation0]]
  $region84: #{grasp_eval_forward.1} parent=0
    _
  %s10 = ssub.s32 1, %s8
  %s11 = scalar_select 0, %s10, %s8
  $region1: #{grasp_eval_forward.1} parent=0
    #allocation2 [shape = 'u8[20480]{0}', space=vmem, size = 0x5000, scoped, tag = 'input window, operand 0, single buffered']
    #allocation3 [shape = 's32[1]{0}', space=sflag, size = 0x4, scoped, tag = 'scoped memory for grasp_eval_forward.1']
    #allocation4 [shape = 'u8[270336]{0}', space=vmem, size = 0x42000, scoped, tag = 'input window, operand 1, single buffered']
    #allocation5 [shape = 's32[1]{0}', space=sflag, size = 0x4, scoped, tag = 'scoped memory for grasp_eval_forward.1']
    #allocation6 [shape = 'u8[65536]{0}', space=vmem, size = 0x10000, scoped, tag = 'input window, operand 3, single buffered']
    #allocation7 [shape = 'u8[32768]{0}', space=vmem, size = 0x8000, scoped, tag = 'input window, operand 5, single buffered']
    #allocation8 [shape = 's32[1]{0}', space=sflag, size = 0x4, scoped, tag = 'scoped memory for grasp_eval_forward.1']
    #allocation9 [shape = 'u8[4096]{0}', space=vmem, size = 0x1000, scoped, tag = 'output window, operand 0, single buffered']
    %12 = vsyncpa [#allocation3], 0
    %13 = vsyncpa [#allocation5], 0
    %14 = vsyncpa [#allocation8], 0
    // Predicated region
    $region2: #{grasp_eval_forward.1} parent=1 // pred_check
      _
    $region3: #{grasp_eval_forward.1} parent=1 // pred_check_branch
      %16 = sbr.rel (0) target = $region5
    $region4: #{grasp_eval_forward.1} parent=1 // pred_region
      %s18 = ssub.s32 640, 320
      %19 = vsyncadd [#allocation3], %s18
      %s20 = sshll.u32 [#allocation2], 4
      %s21 = int_to_ptr.vmem [resolvable:$true] %s20
      %26 = dma.hbm_to_vmem [thread:$0]  %s0, 320, %s21, [#allocation3], 320, 320, 20
    $region5: #{grasp_eval_forward.1} parent=1 // pred_fallthru
      _
    // Predicated region
    $region6: #{grasp_eval_forward.1} parent=1 // pred_check
      _
    $region7: #{grasp_eval_forward.1} parent=1 // pred_check_branch
      %28 = sbr.rel (0) target = $region9
    $region8: #{grasp_eval_forward.1} parent=1 // pred_region
      %s30 = ssub.s32 8448, 8448
      %31 = vsyncadd [#allocation5], %s30
      %s32 = sshll.u32 [#allocation4], 4
      %s33 = int_to_ptr.vmem [resolvable:$true] %s32
      %38 = dma.hbm_to_vmem [thread:$0]  %s1, 8448, %s33, [#allocation5], 128, 128, 8
    $region9: #{grasp_eval_forward.1} parent=1 // pred_fallthru
      _
    // Predicated region
    $region10: #{grasp_eval_forward.1} parent=1 // pred_check
      _
    $region11: #{grasp_eval_forward.1} parent=1 // pred_check_branch
      %40 = sbr.rel (0) target = $region13
    $region12: #{grasp_eval_forward.1} parent=1 // pred_region
      _
    $region13: #{grasp_eval_forward.1} parent=1 // pred_fallthru
      _
    // Predicated region
    $region14: #{grasp_eval_forward.1} parent=1 // pred_check
      _
    $region15: #{grasp_eval_forward.1} parent=1 // pred_check_branch
      %42 = sbr.rel (0) target = $region17
    $region16: #{grasp_eval_forward.1} parent=1 // pred_region
      %s44 = ssub.s32 2048, 2048
      %45 = vsyncadd [#allocation5], %s44
      %s46 = sshll.u32 [#allocation6], 4
      %s47 = int_to_ptr.vmem [resolvable:$true] %s46
      %52 = dma.hbm_to_vmem [thread:$0]  %s3, 2048, %s47, [#allocation5], 64, 64, 4
    $region17: #{grasp_eval_forward.1} parent=1 // pred_fallthru
      _
    // Predicated region
    $region18: #{grasp_eval_forward.1} parent=1 // pred_check
      _
    $region19: #{grasp_eval_forward.1} parent=1 // pred_check_branch
      %54 = sbr.rel (0) target = $region21
    $region20: #{grasp_eval_forward.1} parent=1 // pred_region
      _
    $region21: #{grasp_eval_forward.1} parent=1 // pred_fallthru
      _
    // Predicated region
    $region22: #{grasp_eval_forward.1} parent=1 // pred_check
      _
    $region23: #{grasp_eval_forward.1} parent=1 // pred_check_branch
      %56 = sbr.rel (0) target = $region25
    $region24: #{grasp_eval_forward.1} parent=1 // pred_region
      %s58 = ssub.s32 1024, 1024
      %59 = vsyncadd [#allocation8], %s58
      %s60 = sshll.u32 [#allocation7], 4
      %s61 = int_to_ptr.vmem [resolvable:$true] %s60
      %66 = dma.hbm_to_vmem [thread:$0]  %s5, 1024, %s61, [#allocation8], 64, 64, 4
    $region25: #{grasp_eval_forward.1} parent=1 // pred_fallthru
      _
    // Predicated region
    $region26: #{grasp_eval_forward.1} parent=1 // pred_check
      _
    $region27: #{grasp_eval_forward.1} parent=1 // pred_check_branch
      %68 = sbr.rel (0) target = $region29
    $region28: #{grasp_eval_forward.1} parent=1 // pred_region
      _
    $region29: #{grasp_eval_forward.1} parent=1 // pred_fallthru
      _
    // Predicated region
    $region30: #{grasp_eval_forward.1} parent=1 // pred_check
      _
    $region31: #{grasp_eval_forward.1} parent=1 // pred_check_branch
      %70 = sbr.rel (0) target = $region33
    $region32: #{grasp_eval_forward.1} parent=1 // pred_region
      %71 = dma.done [#allocation3], 640
    $region33: #{grasp_eval_forward.1} parent=1 // pred_fallthru
      _
    // Predicated region
    $region34: #{grasp_eval_forward.1} parent=1 // pred_check
      _
    $region35: #{grasp_eval_forward.1} parent=1 // pred_check_branch
      %73 = sbr.rel (0) target = $region37
    $region36: #{grasp_eval_forward.1} parent=1 // pred_region
      %74 = dma.done [#allocation5], 8448
    $region37: #{grasp_eval_forward.1} parent=1 // pred_fallthru
      _
    // Predicated region
    $region38: #{grasp_eval_forward.1} parent=1 // pred_check
      _
    $region39: #{grasp_eval_forward.1} parent=1 // pred_check_branch
      %76 = sbr.rel (0) target = $region41
    $region40: #{grasp_eval_forward.1} parent=1 // pred_region
      %77 = dma.done [#allocation5], 2048
    $region41: #{grasp_eval_forward.1} parent=1 // pred_fallthru
      _
    // Predicated region
    $region42: #{grasp_eval_forward.1} parent=1 // pred_check
      _
    $region43: #{grasp_eval_forward.1} parent=1 // pred_check_branch
      %79 = sbr.rel (0) target = $region45
    $region44: #{grasp_eval_forward.1} parent=1 // pred_region
      %80 = dma.done [#allocation8], 1024
    $region45: #{grasp_eval_forward.1} parent=1 // pred_fallthru
      _
    %v82 = vld [vmem:[#allocation2] sm:$0xff]
    %v83 = vld [vmem:[#allocation2 + $0x8] sm:$0xff]
    %v84 = vld [vmem:[#allocation2 + $0x10] sm:$0xf]
    %v85 = vld [vmem:[#allocation2 + $0x14] sm:$0xff]
    %v86 = vld [vmem:[#allocation2 + $0x1c] sm:$0xff]
    %v87 = vld [vmem:[#allocation2 + $0x24] sm:$0xf]
    %v94 = vcombine.low %v82, %v85
    %v95 = vcombine.high %v82, %v85
    %v96 = vcombine.low %v83, %v86
    %v97 = vcombine.high %v83, %v86
    %v98 = vcombine.low %v84, %v87
    %v104 = vpack.c.bf16 %v94, %v94
    %v105 = vpack.c.bf16 %v95, %v95
    %v106 = vpack.c.bf16 %v96, %v96
    %v107 = vpack.c.bf16 %v97, %v97
    %v108 = vpack.c.bf16 %v98, %v98
    %v109 = vld [vmem:[#allocation4] sm:$0xff]
    %v110 = vld [vmem:[#allocation4 + $0x8] sm:$0xff]
    %v111 = vld [vmem:[#allocation4 + $0x10] sm:$0xff]
    %v112 = vld [vmem:[#allocation4 + $0x18] sm:$0xff]
    %v113 = vld [vmem:[#allocation4 + $0x20] sm:$0xff]
    %v114 = vld [vmem:[#allocation4 + $0x28] sm:$0xff]
    %v115 = vld [vmem:[#allocation4 + $0x30] sm:$0xff]
    %v116 = vld [vmem:[#allocation4 + $0x38] sm:$0xff]
    %v117 = vld [vmem:[#allocation4 + $0x40] sm:$0xff]
    %v118 = vld [vmem:[#allocation4 + $0x48] sm:$0xff]
    %v119 = vld [vmem:[#allocation4 + $0x50] sm:$0xff]
    %v120 = vld [vmem:[#allocation4 + $0x58] sm:$0xff]
    %v121 = vld [vmem:[#allocation4 + $0x60] sm:$0xff]
    %v122 = vld [vmem:[#allocation4 + $0x68] sm:$0xff]
    %v123 = vld [vmem:[#allocation4 + $0x70] sm:$0xff]
    %v124 = vld [vmem:[#allocation4 + $0x78] sm:$0xff]
    %v125 = vld [vmem:[#allocation4 + $0x80] sm:$0xff]
    %v126 = vld [vmem:[#allocation4 + $0x88] sm:$0xff]
    %v127 = vld [vmem:[#allocation4 + $0x90] sm:$0xff]
    %v128 = vld [vmem:[#allocation4 + $0x98] sm:$0xff]
    %v129 = vld [vmem:[#allocation4 + $0xa0] sm:$0xff]
    %v130 = vld [vmem:[#allocation4 + $0xa8] sm:$0xff]
    %v131 = vld [vmem:[#allocation4 + $0xb0] sm:$0xff]
    %v132 = vld [vmem:[#allocation4 + $0xb8] sm:$0xff]
    %v133 = vld [vmem:[#allocation4 + $0xc0] sm:$0xff]
    %v134 = vld [vmem:[#allocation4 + $0xc8] sm:$0xff]
    %v135 = vld [vmem:[#allocation4 + $0xd0] sm:$0xff]
    %v136 = vld [vmem:[#allocation4 + $0xd8] sm:$0xff]
    %v137 = vld [vmem:[#allocation4 + $0xe0] sm:$0xff]
    %v138 = vld [vmem:[#allocation4 + $0xe8] sm:$0xff]
    %v139 = vld [vmem:[#allocation4 + $0xf0] sm:$0xff]
    %v140 = vld [vmem:[#allocation4 + $0xf8] sm:$0xff]
    %v141 = vld [vmem:[#allocation4 + $0x100] sm:$0xff]
    %v142 = vld [vmem:[#allocation4 + $0x108] sm:$0xff]
    %v143 = vld [vmem:[#allocation4 + $0x110] sm:$0xff]
    %v144 = vld [vmem:[#allocation4 + $0x118] sm:$0xff]
    %v145 = vld [vmem:[#allocation4 + $0x120] sm:$0xff]
    %v146 = vld [vmem:[#allocation4 + $0x128] sm:$0xff]
    %v147 = vld [vmem:[#allocation4 + $0x130] sm:$0xff]
    %v148 = vld [vmem:[#allocation4 + $0x138] sm:$0xff]
    %v149 = vld [vmem:[#allocation4 + $0x140] sm:$0xff]
    %v150 = vld [vmem:[#allocation4 + $0x148] sm:$0xff]
    %v151 = vld [vmem:[#allocation4 + $0x150] sm:$0xff]
    %v152 = vld [vmem:[#allocation4 + $0x158] sm:$0xff]
    %v153 = vld [vmem:[#allocation4 + $0x160] sm:$0xff]
    %v154 = vld [vmem:[#allocation4 + $0x168] sm:$0xff]
    %v155 = vld [vmem:[#allocation4 + $0x170] sm:$0xff]
    %v156 = vld [vmem:[#allocation4 + $0x178] sm:$0xff]
    %v157 = vld [vmem:[#allocation4 + $0x180] sm:$0xff]
    %v158 = vld [vmem:[#allocation4 + $0x188] sm:$0xff]
    %v159 = vld [vmem:[#allocation4 + $0x190] sm:$0xff]
    %v160 = vld [vmem:[#allocation4 + $0x198] sm:$0xff]
    %v161 = vld [vmem:[#allocation4 + $0x1a0] sm:$0xff]
    %v162 = vld [vmem:[#allocation4 + $0x1a8] sm:$0xff]
    %v163 = vld [vmem:[#allocation4 + $0x1b0] sm:$0xff]
    %v164 = vld [vmem:[#allocation4 + $0x1b8] sm:$0xff]
    %v165 = vld [vmem:[#allocation4 + $0x1c0] sm:$0xff]
    %v166 = vld [vmem:[#allocation4 + $0x1c8] sm:$0xff]
    %v167 = vld [vmem:[#allocation4 + $0x1d0] sm:$0xff]
    %v168 = vld [vmem:[#allocation4 + $0x1d8] sm:$0xff]
    %v169 = vld [vmem:[#allocation4 + $0x1e0] sm:$0xff]
    %v170 = vld [vmem:[#allocation4 + $0x1e8] sm:$0xff]
    %v171 = vld [vmem:[#allocation4 + $0x1f0] sm:$0xff]
    %v172 = vld [vmem:[#allocation4 + $0x1f8] sm:$0xff]
    %v173 = vld [vmem:[#allocation4 + $0x200] sm:$0xff]
    %v174 = vld [vmem:[#allocation4 + $0x208] sm:$0xff]
    %v175 = vld [vmem:[%s2] sm:$0x3]
    %v177 = vlaneseq
    %v178 = vshrl.u32 %v177, 7
    %v179 = vsub.s32 0, %v178
    %v180 = vrot.slane %v175, %v179
    %v181 = vlaneseq
    %v182 = vshrl.u32 %v181, 7
    %v183 = vsub.s32 1, %v182
    %v184 = vrot.slane %v175, %v183
    %v253 = vunpack.c.l.b16 %v109
    %v254 = vunpack.c.h.b16 %v109
    %v255 = vunpack.c.l.b16 %v110
    %v256 = vunpack.c.h.b16 %v110
    %v257 = vunpack.c.l.b16 %v111
    %v258 = vunpack.c.h.b16 %v111
    %v259 = vunpack.c.l.b16 %v112
    %v260 = vunpack.c.h.b16 %v112
    %v261 = vunpack.c.l.b16 %v113
    %v262 = vunpack.c.h.b16 %v113
    %v263 = vunpack.c.l.b16 %v114
    %v264 = vunpack.c.h.b16 %v114
    %v265 = vunpack.c.l.b16 %v115
    %v266 = vunpack.c.h.b16 %v115
    %v267 = vunpack.c.l.b16 %v116
    %v268 = vunpack.c.h.b16 %v116
    %v269 = vunpack.c.l.b16 %v117
    %v270 = vunpack.c.h.b16 %v117
    %v271 = vunpack.c.l.b16 %v118
    %v272 = vunpack.c.h.b16 %v118
    %v273 = vunpack.c.l.b16 %v119
    %v274 = vunpack.c.h.b16 %v119
    %v275 = vunpack.c.l.b16 %v120
    %v276 = vunpack.c.h.b16 %v120
    %v277 = vunpack.c.l.b16 %v121
    %v278 = vunpack.c.h.b16 %v121
    %v279 = vunpack.c.l.b16 %v122
    %v280 = vunpack.c.h.b16 %v122
    %v281 = vunpack.c.l.b16 %v123
    %v282 = vunpack.c.h.b16 %v123
    %v283 = vunpack.c.l.b16 %v124
    %v284 = vunpack.c.h.b16 %v124
    %v285 = vunpack.c.l.b16 %v125
    %v286 = vunpack.c.h.b16 %v125
    %v287 = vunpack.c.l.b16 %v126
    %v288 = vunpack.c.h.b16 %v126
    %v289 = vunpack.c.l.b16 %v127
    %v290 = vunpack.c.h.b16 %v127
    %v291 = vunpack.c.l.b16 %v128
    %v292 = vunpack.c.h.b16 %v128
    %v293 = vunpack.c.l.b16 %v129
    %v294 = vunpack.c.h.b16 %v129
    %v295 = vunpack.c.l.b16 %v130
    %v296 = vunpack.c.h.b16 %v130
    %v297 = vunpack.c.l.b16 %v131
    %v298 = vunpack.c.h.b16 %v131
    %v299 = vunpack.c.l.b16 %v132
    %v300 = vunpack.c.h.b16 %v132
    %v301 = vunpack.c.l.b16 %v133
    %v302 = vunpack.c.h.b16 %v133
    %v303 = vunpack.c.l.b16 %v134
    %v304 = vunpack.c.h.b16 %v134
    %v305 = vunpack.c.l.b16 %v135
    %v306 = vunpack.c.h.b16 %v135
    %v307 = vunpack.c.l.b16 %v136
    %v308 = vunpack.c.h.b16 %v136
    %v309 = vunpack.c.l.b16 %v137
    %v310 = vunpack.c.h.b16 %v137
    %v311 = vunpack.c.l.b16 %v138
    %v312 = vunpack.c.h.b16 %v138
    %v313 = vunpack.c.l.b16 %v139
    %v314 = vunpack.c.h.b16 %v139
    %v315 = vunpack.c.l.b16 %v140
    %v316 = vunpack.c.h.b16 %v140
    %v317 = vunpack.c.l.b16 %v141
    %v318 = vunpack.c.h.b16 %v141
    %v319 = vunpack.c.l.b16 %v142
    %v320 = vunpack.c.h.b16 %v142
    %v321 = vunpack.c.l.b16 %v143
    %v322 = vunpack.c.h.b16 %v143
    %v323 = vunpack.c.l.b16 %v144
    %v324 = vunpack.c.h.b16 %v144
    %v325 = vunpack.c.l.b16 %v145
    %v326 = vunpack.c.h.b16 %v145
    %v327 = vunpack.c.l.b16 %v146
    %v328 = vunpack.c.h.b16 %v146
    %v329 = vunpack.c.l.b16 %v147
    %v330 = vunpack.c.h.b16 %v147
    %v331 = vunpack.c.l.b16 %v148
    %v332 = vunpack.c.h.b16 %v148
    %v333 = vunpack.c.l.b16 %v149
    %v334 = vunpack.c.h.b16 %v149
    %v335 = vunpack.c.l.b16 %v150
    %v336 = vunpack.c.h.b16 %v150
    %v337 = vunpack.c.l.b16 %v151
    %v338 = vunpack.c.h.b16 %v151
    %v339 = vunpack.c.l.b16 %v152
    %v340 = vunpack.c.h.b16 %v152
    %v341 = vunpack.c.l.b16 %v153
    %v342 = vunpack.c.h.b16 %v153
    %v343 = vunpack.c.l.b16 %v154
    %v344 = vunpack.c.h.b16 %v154
    %v345 = vunpack.c.l.b16 %v155
    %v346 = vunpack.c.h.b16 %v155
    %v347 = vunpack.c.l.b16 %v156
    %v348 = vunpack.c.h.b16 %v156
    %v349 = vunpack.c.l.b16 %v157
    %v350 = vunpack.c.h.b16 %v157
    %v351 = vunpack.c.l.b16 %v158
    %v352 = vunpack.c.h.b16 %v158
    %v353 = vunpack.c.l.b16 %v159
    %v354 = vunpack.c.h.b16 %v159
    %v355 = vunpack.c.l.b16 %v160
    %v356 = vunpack.c.h.b16 %v160
    %v357 = vunpack.c.l.b16 %v161
    %v358 = vunpack.c.h.b16 %v161
    %v359 = vunpack.c.l.b16 %v162
    %v360 = vunpack.c.h.b16 %v162
    %v361 = vunpack.c.l.b16 %v163
    %v362 = vunpack.c.h.b16 %v163
    %v363 = vunpack.c.l.b16 %v164
    %v364 = vunpack.c.h.b16 %v164
    %v365 = vunpack.c.l.b16 %v165
    %v366 = vunpack.c.h.b16 %v165
    %v367 = vunpack.c.l.b16 %v166
    %v368 = vunpack.c.h.b16 %v166
    %v369 = vunpack.c.l.b16 %v167
    %v370 = vunpack.c.h.b16 %v167
    %v371 = vunpack.c.l.b16 %v168
    %v372 = vunpack.c.h.b16 %v168
    %v373 = vunpack.c.l.b16 %v169
    %v374 = vunpack.c.h.b16 %v169
    %v375 = vunpack.c.l.b16 %v170
    %v376 = vunpack.c.h.b16 %v170
    %v377 = vunpack.c.l.b16 %v171
    %v378 = vunpack.c.h.b16 %v171
    %v379 = vunpack.c.l.b16 %v172
    %v380 = vunpack.c.h.b16 %v172
    %v381 = vunpack.c.l.b16 %v173
    %v382 = vunpack.c.h.b16 %v173
    %v383 = vunpack.c.l.b16 %v174
    %v384 = vunpack.c.h.b16 %v174
    %v385 = vpack.c.b16 %v255, %v253
    %v386 = vpack.c.b16 %v256, %v254
    %v387 = vpack.c.b16 %v259, %v257
    %v388 = vpack.c.b16 %v260, %v258
    %v389 = vpack.c.b16 %v263, %v261
    %v390 = vpack.c.b16 %v264, %v262
    %v391 = vpack.c.b16 %v267, %v265
    %v392 = vpack.c.b16 %v268, %v266
    %v393 = vpack.c.b16 %v271, %v269
    %v394 = vpack.c.b16 %v272, %v270
    %v395 = vpack.c.b16 %v275, %v273
    %v396 = vpack.c.b16 %v276, %v274
    %v397 = vpack.c.b16 %v279, %v277
    %v398 = vpack.c.b16 %v280, %v278
    %v399 = vpack.c.b16 %v283, %v281
    %v400 = vpack.c.b16 %v284, %v282
    %v401 = vpack.c.b16 %v287, %v285
    %v402 = vpack.c.b16 %v288, %v286
    %v403 = vpack.c.b16 %v291, %v289
    %v404 = vpack.c.b16 %v292, %v290
    %v405 = vpack.c.b16 %v295, %v293
    %v406 = vpack.c.b16 %v296, %v294
    %v407 = vpack.c.b16 %v299, %v297
    %v408 = vpack.c.b16 %v300, %v298
    %v409 = vpack.c.b16 %v303, %v301
    %v410 = vpack.c.b16 %v304, %v302
    %v411 = vpack.c.b16 %v307, %v305
    %v412 = vpack.c.b16 %v308, %v306
    %v413 = vpack.c.b16 %v311, %v309
    %v414 = vpack.c.b16 %v312, %v310
    %v415 = vpack.c.b16 %v315, %v313
    %v416 = vpack.c.b16 %v316, %v314
    %v417 = vpack.c.b16 %v319, %v317
    %v418 = vpack.c.b16 %v320, %v318
    %v419 = vpack.c.b16 %v323, %v321
    %v420 = vpack.c.b16 %v324, %v322
    %v421 = vpack.c.b16 %v327, %v325
    %v422 = vpack.c.b16 %v328, %v326
    %v423 = vpack.c.b16 %v331, %v329
    %v424 = vpack.c.b16 %v332, %v330
    %v425 = vpack.c.b16 %v335, %v333
    %v426 = vpack.c.b16 %v336, %v334
    %v427 = vpack.c.b16 %v339, %v337
    %v428 = vpack.c.b16 %v340, %v338
    %v429 = vpack.c.b16 %v343, %v341
    %v430 = vpack.c.b16 %v344, %v342
    %v431 = vpack.c.b16 %v347, %v345
    %v432 = vpack.c.b16 %v348, %v346
    %v433 = vpack.c.b16 %v351, %v349
    %v434 = vpack.c.b16 %v352, %v350
    %v435 = vpack.c.b16 %v355, %v353
    %v436 = vpack.c.b16 %v356, %v354
    %v437 = vpack.c.b16 %v359, %v357
    %v438 = vpack.c.b16 %v360, %v358
    %v439 = vpack.c.b16 %v363, %v361
    %v440 = vpack.c.b16 %v364, %v362
    %v441 = vpack.c.b16 %v367, %v365
    %v442 = vpack.c.b16 %v368, %v366
    %v443 = vpack.c.b16 %v371, %v369
    %v444 = vpack.c.b16 %v372, %v370
    %v445 = vpack.c.b16 %v375, %v373
    %v446 = vpack.c.b16 %v376, %v374
    %v447 = vpack.c.b16 %v379, %v377
    %v448 = vpack.c.b16 %v380, %v378
    %v449 = vpack.c.b16 %v383, %v381
    %v450 = vpack.c.b16 %v384, %v382
    %vm515 = vcmask 121856
    %v517 = vsel %vm515, %v108, 0
    %vm519 = vcmask 1046528
    %vm520 = vcmask 1047552
    %v521 = vsel %vm519, 4294967295, 65535
    %v522 = vsel %vm520, %v521, 0
    %v524 = vand.u32 %v449, %v522
    %v527 = vand.u32 %v450, %v522
    %529 = vmatprep.subr.bf16.mxu0 %v386
    %530 = vmatpush1.bf16.msra.mxu0 %v385
    %531 = vmatprep.subr.bf16.mxu0 %v388
    %532 = vmatpush1.bf16.msra.mxu0 %v387
    %533 = vmatprep.subr.bf16.mxu0 %v390
    %534 = vmatpush1.bf16.msra.mxu0 %v389
    %535 = vmatprep.subr.bf16.mxu0 %v392
    %536 = vmatpush1.bf16.msra.mxu0 %v391
    %537 = vmatprep.subr.bf16.mxu0 %v394
    %538 = vmatpush1.bf16.msra.mxu0 %v393
    %539 = vmatprep.subr.bf16.mxu0 %v396
    %540 = vmatpush1.bf16.msra.mxu0 %v395
    %541 = vmatprep.subr.bf16.mxu0 %v398
    %542 = vmatpush1.bf16.msra.mxu0 %v397
    %543 = vmatprep.subr.bf16.mxu0 %v400
    %544 = vmatpush1.bf16.msra.mxu0 %v399
    %545 = vmatprep.subr.bf16.mxu0 %v402
    %546 = vmatpush1.bf16.msra.mxu0 %v401
    %547 = vmatprep.subr.bf16.mxu0 %v404
    %548 = vmatpush1.bf16.msra.mxu0 %v403
    %549 = vmatprep.subr.bf16.mxu0 %v406
    %550 = vmatpush1.bf16.msra.mxu0 %v405
    %551 = vmatprep.subr.bf16.mxu0 %v408
    %552 = vmatpush1.bf16.msra.mxu0 %v407
    %553 = vmatprep.subr.bf16.mxu0 %v410
    %554 = vmatpush1.bf16.msra.mxu0 %v409
    %555 = vmatprep.subr.bf16.mxu0 %v412
    %556 = vmatpush1.bf16.msra.mxu0 %v411
    %557 = vmatprep.subr.bf16.mxu0 %v414
    %558 = vmatpush1.bf16.msra.mxu0 %v413
    %559 = vmatprep.subr.bf16.mxu0 %v416
    %560 = vmatpush1.bf16.msra.mxu0 %v415
    %561 = vmatprep.mubr.bf16.mxu0 %v105
    %562 = vmatmul.mubr.bf16.gmra.mrb[0].mxu0 %v104
    %v563 = vpop.f32.mrb[0].mxu0
    %v564 = vadd.f32 %v180, %v563
    %v565 = vpop.f32.mrb[0].mxu0
    %v566 = vadd.f32 %v184, %v565
    %v567 = vpop.f32.mrb[0].mxu0
    %v568 = vpop.f32.mrb[0].mxu0
    %569 = vdwg.mxu0
    %570 = vmatprep.subr.bf16.mxu0 %v418
    %571 = vmatpush1.bf16.msra.mxu0 %v417
    %572 = vmatprep.subr.bf16.mxu0 %v420
    %573 = vmatpush1.bf16.msra.mxu0 %v419
    %574 = vmatprep.subr.bf16.mxu0 %v422
    %575 = vmatpush1.bf16.msra.mxu0 %v421
    %576 = vmatprep.subr.bf16.mxu0 %v424
    %577 = vmatpush1.bf16.msra.mxu0 %v423
    %578 = vmatprep.subr.bf16.mxu0 %v426
    %579 = vmatpush1.bf16.msra.mxu0 %v425
    %580 = vmatprep.subr.bf16.mxu0 %v428
    %581 = vmatpush1.bf16.msra.mxu0 %v427
    %582 = vmatprep.subr.bf16.mxu0 %v430
    %583 = vmatpush1.bf16.msra.mxu0 %v429
    %584 = vmatprep.subr.bf16.mxu0 %v432
    %585 = vmatpush1.bf16.msra.mxu0 %v431
    %586 = vmatprep.subr.bf16.mxu0 %v434
    %587 = vmatpush1.bf16.msra.mxu0 %v433
    %588 = vmatprep.subr.bf16.mxu0 %v436
    %589 = vmatpush1.bf16.msra.mxu0 %v435
    %590 = vmatprep.subr.bf16.mxu0 %v438
    %591 = vmatpush1.bf16.msra.mxu0 %v437
    %592 = vmatprep.subr.bf16.mxu0 %v440
    %593 = vmatpush1.bf16.msra.mxu0 %v439
    %594 = vmatprep.subr.bf16.mxu0 %v442
    %595 = vmatpush1.bf16.msra.mxu0 %v441
    %596 = vmatprep.subr.bf16.mxu0 %v444
    %597 = vmatpush1.bf16.msra.mxu0 %v443
    %598 = vmatprep.subr.bf16.mxu0 %v446
    %599 = vmatpush1.bf16.msra.mxu0 %v445
    %600 = vmatprep.subr.bf16.mxu0 %v448
    %601 = vmatpush1.bf16.msra.mxu0 %v447
    %602 = vmatprep.mubr.bf16.mxu0 %v107
    %603 = vmatmul.mubr.bf16.gmra.mrb[0].mxu0 %v106
    %v604 = vpop.f32.mrb[0].mxu0
    %v605 = vadd.f32 %v564, %v604
    %v606 = vpop.f32.mrb[0].mxu0
    %v607 = vadd.f32 %v566, %v606
    %v608 = vpop.f32.mrb[0].mxu0
    %v609 = vpop.f32.mrb[0].mxu0
    %610 = vdwg.mxu0
    %611 = vmatprep.subr.bf16.mxu0 %v527
    %612 = vmatpush1.bf16.msra.mxu0 %v524
    %613 = vmatprep.subr.bf16.mxu0 0
    %614 = vmatpush1.bf16.msra.mxu0 0
    %615 = vmatprep.subr.bf16.mxu0 0
    %616 = vmatpush1.bf16.msra.mxu0 0
    %617 = vmatprep.subr.bf16.mxu0 0
    %618 = vmatpush1.bf16.msra.mxu0 0
    %619 = vmatprep.subr.bf16.mxu0 0
    %620 = vmatpush1.bf16.msra.mxu0 0
    %621 = vmatprep.subr.bf16.mxu0 0
    %622 = vmatpush1.bf16.msra.mxu0 0
    %623 = vmatprep.subr.bf16.mxu0 0
    %624 = vmatpush1.bf16.msra.mxu0 0
    %625 = vmatprep.subr.bf16.mxu0 0
    %626 = vmatpush1.bf16.msra.mxu0 0
    %627 = vmatprep.subr.bf16.mxu0 0
    %628 = vmatpush1.bf16.msra.mxu0 0
    %629 = vmatprep.subr.bf16.mxu0 0
    %630 = vmatpush1.bf16.msra.mxu0 0
    %631 = vmatprep.subr.bf16.mxu0 0
    %632 = vmatpush1.bf16.msra.mxu0 0
    %633 = vmatprep.subr.bf16.mxu0 0
    %634 = vmatpush1.bf16.msra.mxu0 0
    %635 = vmatprep.subr.bf16.mxu0 0
    %636 = vmatpush1.bf16.msra.mxu0 0
    %637 = vmatprep.subr.bf16.mxu0 0
    %638 = vmatpush1.bf16.msra.mxu0 0
    %639 = vmatprep.subr.bf16.mxu0 0
    %640 = vmatpush1.bf16.msra.mxu0 0
    %641 = vmatprep.subr.bf16.mxu0 0
    %642 = vmatpush1.bf16.msra.mxu0 0
    %643 = vmatprep.mubr.bf16.mxu0 0
    %644 = vmatmul.mubr.bf16.gmra.mrb[0].mxu0 %v517
    %v645 = vpop.f32.mrb[0].mxu0
    %v646 = vadd.f32 %v605, %v645
    %v647 = vpop.f32.mrb[0].mxu0
    %v648 = vadd.f32 %v607, %v647
    %v649 = vpop.f32.mrb[0].mxu0
    %v650 = vpop.f32.mrb[0].mxu0
    %651 = vdwg.mxu0
    %v652 = vmax.f32 %v646, 0.0
    %v653 = vmax.f32 %v648, 0.0
    %v654 = vpack.c.bf16 %v652, %v652
    %v655 = vpack.c.bf16 %v653, %v653
    %v656 = vld [vmem:[#allocation6] sm:$0xf]
    %v657 = vld [vmem:[#allocation6 + $0x4] sm:$0xf]
    %v658 = vld [vmem:[#allocation6 + $0x8] sm:$0xf]
    %v659 = vld [vmem:[#allocation6 + $0xc] sm:$0xf]
    %v660 = vld [vmem:[#allocation6 + $0x10] sm:$0xf]
    %v661 = vld [vmem:[#allocation6 + $0x14] sm:$0xf]
    %v662 = vld [vmem:[#allocation6 + $0x18] sm:$0xf]
    %v663 = vld [vmem:[#allocation6 + $0x1c] sm:$0xf]
    %v664 = vld [vmem:[#allocation6 + $0x20] sm:$0xf]
    %v665 = vld [vmem:[#allocation6 + $0x24] sm:$0xf]
    %v666 = vld [vmem:[#allocation6 + $0x28] sm:$0xf]
    %v667 = vld [vmem:[#allocation6 + $0x2c] sm:$0xf]
    %v668 = vld [vmem:[#allocation6 + $0x30] sm:$0xf]
    %v669 = vld [vmem:[#allocation6 + $0x34] sm:$0xf]
    %v670 = vld [vmem:[#allocation6 + $0x38] sm:$0xf]
    %v671 = vld [vmem:[#allocation6 + $0x3c] sm:$0xf]
    %v672 = vld [vmem:[#allocation6 + $0x40] sm:$0xf]
    %v673 = vld [vmem:[#allocation6 + $0x44] sm:$0xf]
    %v674 = vld [vmem:[#allocation6 + $0x48] sm:$0xf]
    %v675 = vld [vmem:[#allocation6 + $0x4c] sm:$0xf]
    %v676 = vld [vmem:[#allocation6 + $0x50] sm:$0xf]
    %v677 = vld [vmem:[#allocation6 + $0x54] sm:$0xf]
    %v678 = vld [vmem:[#allocation6 + $0x58] sm:$0xf]
    %v679 = vld [vmem:[#allocation6 + $0x5c] sm:$0xf]
    %v680 = vld [vmem:[#allocation6 + $0x60] sm:$0xf]
    %v681 = vld [vmem:[#allocation6 + $0x64] sm:$0xf]
    %v682 = vld [vmem:[#allocation6 + $0x68] sm:$0xf]
    %v683 = vld [vmem:[#allocation6 + $0x6c] sm:$0xf]
    %v684 = vld [vmem:[#allocation6 + $0x70] sm:$0xf]
    %v685 = vld [vmem:[#allocation6 + $0x74] sm:$0xf]
    %v686 = vld [vmem:[#allocation6 + $0x78] sm:$0xf]
    %v687 = vld [vmem:[#allocation6 + $0x7c] sm:$0xf]
    %v688 = vld [vmem:[%s4] sm:$0x1]
    %v690 = vlaneseq
    %v691 = vshrl.u32 %v690, 7
    %v692 = vsub.s32 0, %v691
    %v693 = vrot.slane %v688, %v692
    %v727 = vunpack.c.l.b16 %v656
    %v728 = vunpack.c.l.b16 %v657
    %v729 = vunpack.c.l.b16 %v658
    %v730 = vunpack.c.l.b16 %v659
    %v731 = vunpack.c.l.b16 %v660
    %v732 = vunpack.c.l.b16 %v661
    %v733 = vunpack.c.l.b16 %v662
    %v734 = vunpack.c.l.b16 %v663
    %v735 = vunpack.c.l.b16 %v664
    %v736 = vunpack.c.l.b16 %v665
    %v737 = vunpack.c.l.b16 %v666
    %v738 = vunpack.c.l.b16 %v667
    %v739 = vunpack.c.l.b16 %v668
    %v740 = vunpack.c.l.b16 %v669
    %v741 = vunpack.c.l.b16 %v670
    %v742 = vunpack.c.l.b16 %v671
    %v743 = vunpack.c.l.b16 %v672
    %v744 = vunpack.c.l.b16 %v673
    %v745 = vunpack.c.l.b16 %v674
    %v746 = vunpack.c.l.b16 %v675
    %v747 = vunpack.c.l.b16 %v676
    %v748 = vunpack.c.l.b16 %v677
    %v749 = vunpack.c.l.b16 %v678
    %v750 = vunpack.c.l.b16 %v679
    %v751 = vunpack.c.l.b16 %v680
    %v752 = vunpack.c.l.b16 %v681
    %v753 = vunpack.c.l.b16 %v682
    %v754 = vunpack.c.l.b16 %v683
    %v755 = vunpack.c.l.b16 %v684
    %v756 = vunpack.c.l.b16 %v685
    %v757 = vunpack.c.l.b16 %v686
    %v758 = vunpack.c.l.b16 %v687
    %v759 = vpack.c.b16 %v728, %v727
    %v760 = vpack.c.b16 %v730, %v729
    %v761 = vpack.c.b16 %v732, %v731
    %v762 = vpack.c.b16 %v734, %v733
    %v763 = vpack.c.b16 %v736, %v735
    %v764 = vpack.c.b16 %v738, %v737
    %v765 = vpack.c.b16 %v740, %v739
    %v766 = vpack.c.b16 %v742, %v741
    %v767 = vpack.c.b16 %v744, %v743
    %v768 = vpack.c.b16 %v746, %v745
    %v769 = vpack.c.b16 %v748, %v747
    %v770 = vpack.c.b16 %v750, %v749
    %v771 = vpack.c.b16 %v752, %v751
    %v772 = vpack.c.b16 %v754, %v753
    %v773 = vpack.c.b16 %v756, %v755
    %v774 = vpack.c.b16 %v758, %v757
    %791 = vmatprep.subr.bf16.mxu0 0
    %792 = vmatpush1.bf16.msra.mxu0 %v759
    %793 = vmatprep.subr.bf16.mxu0 0
    %794 = vmatpush1.bf16.msra.mxu0 %v760
    %795 = vmatprep.subr.bf16.mxu0 0
    %796 = vmatpush1.bf16.msra.mxu0 %v761
    %797 = vmatprep.subr.bf16.mxu0 0
    %798 = vmatpush1.bf16.msra.mxu0 %v762
    %799 = vmatprep.subr.bf16.mxu0 0
    %800 = vmatpush1.bf16.msra.mxu0 %v763
    %801 = vmatprep.subr.bf16.mxu0 0
    %802 = vmatpush1.bf16.msra.mxu0 %v764
    %803 = vmatprep.subr.bf16.mxu0 0
    %804 = vmatpush1.bf16.msra.mxu0 %v765
    %805 = vmatprep.subr.bf16.mxu0 0
    %806 = vmatpush1.bf16.msra.mxu0 %v766
    %807 = vmatprep.subr.bf16.mxu0 0
    %808 = vmatpush1.bf16.msra.mxu0 %v767
    %809 = vmatprep.subr.bf16.mxu0 0
    %810 = vmatpush1.bf16.msra.mxu0 %v768
    %811 = vmatprep.subr.bf16.mxu0 0
    %812 = vmatpush1.bf16.msra.mxu0 %v769
    %813 = vmatprep.subr.bf16.mxu0 0
    %814 = vmatpush1.bf16.msra.mxu0 %v770
    %815 = vmatprep.subr.bf16.mxu0 0
    %816 = vmatpush1.bf16.msra.mxu0 %v771
    %817 = vmatprep.subr.bf16.mxu0 0
    %818 = vmatpush1.bf16.msra.mxu0 %v772
    %819 = vmatprep.subr.bf16.mxu0 0
    %820 = vmatpush1.bf16.msra.mxu0 %v773
    %821 = vmatprep.subr.bf16.mxu0 0
    %822 = vmatpush1.bf16.msra.mxu0 %v774
    %823 = vmatprep.mubr.bf16.mxu0 %v655
    %824 = vmatmul.mubr.bf16.gmra.mrb[0].mxu0 %v654
    %v825 = vpop.f32.mrb[0].mxu0
    %v826 = vadd.f32 %v693, %v825
    %v827 = vpop.f32.mrb[0].mxu0
    %v828 = vpop.f32.mrb[0].mxu0
    %v829 = vpop.f32.mrb[0].mxu0
    %830 = vdwg.mxu0
    %v831 = vmax.f32 %v826, 0.0
    %v832 = vpack.c.bf16 %v831, %v831
    %v833 = vld [vmem:[#allocation7] sm:$0xf]
    %v834 = vld [vmem:[#allocation7 + $0x4] sm:$0xf]
    %v835 = vld [vmem:[#allocation7 + $0x8] sm:$0xf]
    %v836 = vld [vmem:[#allocation7 + $0xc] sm:$0xf]
    %v837 = vld [vmem:[#allocation7 + $0x10] sm:$0xf]
    %v838 = vld [vmem:[#allocation7 + $0x14] sm:$0xf]
    %v839 = vld [vmem:[#allocation7 + $0x18] sm:$0xf]
    %v840 = vld [vmem:[#allocation7 + $0x1c] sm:$0xf]
    %v841 = vld [vmem:[#allocation7 + $0x20] sm:$0xf]
    %v842 = vld [vmem:[#allocation7 + $0x24] sm:$0xf]
    %v843 = vld [vmem:[#allocation7 + $0x28] sm:$0xf]
    %v844 = vld [vmem:[#allocation7 + $0x2c] sm:$0xf]
    %v845 = vld [vmem:[#allocation7 + $0x30] sm:$0xf]
    %v846 = vld [vmem:[#allocation7 + $0x34] sm:$0xf]
    %v847 = vld [vmem:[#allocation7 + $0x38] sm:$0xf]
    %v848 = vld [vmem:[#allocation7 + $0x3c] sm:$0xf]
    %v849 = vld [vmem:[%s6] sm:$0x1]
    %v851 = vlaneseq
    %v852 = vshrl.u32 %v851, 7
    %v853 = vsub.s32 0, %v852
    %v854 = vrot.slane %v849, %v853
    %v872 = vunpack.c.l.b16 %v833
    %v873 = vunpack.c.l.b16 %v834
    %v874 = vunpack.c.l.b16 %v835
    %v875 = vunpack.c.l.b16 %v836
    %v876 = vunpack.c.l.b16 %v837
    %v877 = vunpack.c.l.b16 %v838
    %v878 = vunpack.c.l.b16 %v839
    %v879 = vunpack.c.l.b16 %v840
    %v880 = vunpack.c.l.b16 %v841
    %v881 = vunpack.c.l.b16 %v842
    %v882 = vunpack.c.l.b16 %v843
    %v883 = vunpack.c.l.b16 %v844
    %v884 = vunpack.c.l.b16 %v845
    %v885 = vunpack.c.l.b16 %v846
    %v886 = vunpack.c.l.b16 %v847
    %v887 = vunpack.c.l.b16 %v848
    %v888 = vpack.c.b16 %v873, %v872
    %v889 = vpack.c.b16 %v875, %v874
    %v890 = vpack.c.b16 %v877, %v876
    %v891 = vpack.c.b16 %v879, %v878
    %v892 = vpack.c.b16 %v881, %v880
    %v893 = vpack.c.b16 %v883, %v882
    %v894 = vpack.c.b16 %v885, %v884
    %v895 = vpack.c.b16 %v887, %v886
    %904 = vmatprep.subr.bf16.mxu0 0
    %905 = vmatpush1.bf16.msra.mxu0 %v888
    %906 = vmatprep.subr.bf16.mxu0 0
    %907 = vmatpush1.bf16.msra.mxu0 %v889
    %908 = vmatprep.subr.bf16.mxu0 0
    %909 = vmatpush1.bf16.msra.mxu0 %v890
    %910 = vmatprep.subr.bf16.mxu0 0
    %911 = vmatpush1.bf16.msra.mxu0 %v891
    %912 = vmatprep.subr.bf16.mxu0 0
    %913 = vmatpush1.bf16.msra.mxu0 %v892
    %914 = vmatprep.subr.bf16.mxu0 0
    %915 = vmatpush1.bf16.msra.mxu0 %v893
    %916 = vmatprep.subr.bf16.mxu0 0
    %917 = vmatpush1.bf16.msra.mxu0 %v894
    %918 = vmatprep.subr.bf16.mxu0 0
    %919 = vmatpush1.bf16.msra.mxu0 %v895
    %920 = vmatprep.subr.bf16.mxu0 0
    %921 = vmatpush1.bf16.msra.mxu0 0
    %922 = vmatprep.subr.bf16.mxu0 0
    %923 = vmatpush1.bf16.msra.mxu0 0
    %924 = vmatprep.subr.bf16.mxu0 0
    %925 = vmatpush1.bf16.msra.mxu0 0
    %926 = vmatprep.subr.bf16.mxu0 0
    %927 = vmatpush1.bf16.msra.mxu0 0
    %928 = vmatprep.subr.bf16.mxu0 0
    %929 = vmatpush1.bf16.msra.mxu0 0
    %930 = vmatprep.subr.bf16.mxu0 0
    %931 = vmatpush1.bf16.msra.mxu0 0
    %932 = vmatprep.subr.bf16.mxu0 0
    %933 = vmatpush1.bf16.msra.mxu0 0
    %934 = vmatprep.subr.bf16.mxu0 0
    %935 = vmatpush1.bf16.msra.mxu0 0
    %936 = vmatprep.mubr.bf16.mxu0 0
    %937 = vmatmul.mubr.bf16.gmra.mrb[0].mxu0 %v832
    %v938 = vpop.f32.mrb[0].mxu0
    %v939 = vadd.f32 %v854, %v938
    %v940 = vpop.f32.mrb[0].mxu0
    %v941 = vpop.f32.mrb[0].mxu0
    %v942 = vpop.f32.mrb[0].mxu0
    %943 = vdwg.mxu0
    %v944 = vmax.f32 %v939, 0.0
    %945 = vst [vmem:[#allocation9] sm:$0xff] %v944
    // Predicated region
    $region46: #{grasp_eval_forward.1} parent=1 // pred_check
      _
    $region47: #{grasp_eval_forward.1} parent=1 // pred_check_branch
      %947 = sbr.rel (0) target = $region49
    $region48: #{grasp_eval_forward.1} parent=1 // pred_region
      // Predicated region
      $region50: #{grasp_eval_forward.1} parent=48 // pred_check
        _
      $region51: #{grasp_eval_forward.1} parent=48 // pred_check_branch
        %949 = sbr.rel (0) target = $region53
      $region52: #{grasp_eval_forward.1} parent=48 // pred_region
        // Predicated region
        $region54: #{grasp_eval_forward.1} parent=52 // pred_check
          _
        $region55: #{grasp_eval_forward.1} parent=52 // pred_check_branch
          %951 = sbr.rel target = $region57
        $region56: #{grasp_eval_forward.1} parent=52 // pred_region
          // Predicated region
          $region69: #{grasp_eval_forward.1} parent=56 // pred_check
            _
          $region70: #{grasp_eval_forward.1} parent=56 // pred_check_branch
            %966 = sbr.rel (0) target = $region72
          $region71: #{grasp_eval_forward.1} parent=56 // pred_region
            loop: start=0, step=1, limit=1
            $region73: #{grasp_eval_forward.1} parent=71 // loop_pre_header
              _
            $region74: #{grasp_eval_forward.1} parent=71 // loop_header
              %s969 = sphi 0, %s973
              %p970 = scmp.ge.s32.totalorder %s969, 1
              %s974 = sphi [#allocation9], [#allocation9]
              %s975 = sphi %s7, %s7
            $region75: #{grasp_eval_forward.1} parent=71 // loop_header_branch
              %972 = sbr.rel (%p970) target = $region79
            $region76: #{grasp_eval_forward.1} parent=71 // loop_body
              %v976 = vld [vmem:[%s974] sm:$0xf]
              %977 = vst [vmem:[%s975] sm:$0xf] %v976
            $region77: #{grasp_eval_forward.1} parent=71 // loop_footer
              %s973 = sadd.s32 1, %s969
            $region78: #{grasp_eval_forward.1} parent=71 // loop_footer_branch
              %968 = sbr.rel target = $region74
            $region79: #{grasp_eval_forward.1} parent=71 // loop_exit
              _
          $region72: #{grasp_eval_forward.1} parent=56 // pred_fallthru
            _
        $region57: #{grasp_eval_forward.1} parent=52 // pred_fallthru
          _
        // Predicated region
        $region58: #{grasp_eval_forward.1} parent=52 // pred_check
          _
        $region59: #{grasp_eval_forward.1} parent=52 // pred_check_branch
          %953 = sbr.rel (0) target = $region61
        $region60: #{grasp_eval_forward.1} parent=52 // pred_region
          loop: start=0, step=1, limit=1
          $region62: #{grasp_eval_forward.1} parent=60 // loop_pre_header
            _
          $region63: #{grasp_eval_forward.1} parent=60 // loop_header
            %s956 = sphi 0, %s960
            %p957 = scmp.ge.s32.totalorder %s956, 1
            %s961 = sphi [#allocation9], [#allocation9]
            %s962 = sphi %s7, %s7
          $region64: #{grasp_eval_forward.1} parent=60 // loop_header_branch
            %959 = sbr.rel (%p957) target = $region68
          $region65: #{grasp_eval_forward.1} parent=60 // loop_body
            %v963 = vld [vmem:[%s961] sm:$0xf]
            %964 = vst [vmem:[%s962] sm:$0xf] %v963
          $region66: #{grasp_eval_forward.1} parent=60 // loop_footer
            %s960 = sadd.s32 1, %s956
          $region67: #{grasp_eval_forward.1} parent=60 // loop_footer_branch
            %955 = sbr.rel target = $region63
          $region68: #{grasp_eval_forward.1} parent=60 // loop_exit
            _
        $region61: #{grasp_eval_forward.1} parent=52 // pred_fallthru
          _
      $region53: #{grasp_eval_forward.1} parent=48 // pred_fallthru
        _
      %978 = vnop
    $region49: #{grasp_eval_forward.1} parent=1 // pred_fallthru
      _
    // Predicated region
    $region80: #{grasp_eval_forward.1} parent=1 // pred_check
      _
    $region81: #{grasp_eval_forward.1} parent=1 // pred_check_branch
      %980 = sbr.rel (0) target = $region83
    $region82: #{grasp_eval_forward.1} parent=1 // pred_region
      _
    $region83: #{grasp_eval_forward.1} parent=1 // pred_fallthru
      _
    %981 = vsyncpa [#allocation3], 1
    %982 = vsyncpa [#allocation5], 1
    %983 = vsyncpa [#allocation8], 1

</llo_original>
